<compile_context>
chip_gen: v5e
topology: v5e:2x2
jax: 0.10.0
libtpu: 0.0.40
codegen_flags: <defaults>
</compile_context>

<pallas_src>
import functools

import jax
import jax.numpy as jnp
from jax.experimental import pallas as pl
from jax.experimental.pallas import tpu as pltpu


def _round_up(x, m):
    return ((x + m - 1) // m) * m


def vae_kernel(x_ref, eps_ref,
               w1_ref, b1_ref,
               wms_ref, bms_ref,
               w3_ref, b3_ref,
               w4_ref, b4_ref,
               xrec_ref, musig_ref, *, zp):
    # ---- encoder ----
    h = jnp.dot(x_ref[...], w1_ref[...],
                preferred_element_type=jnp.float32) + b1_ref[...]
    h = jnp.maximum(h, 0.0)                                   # ReLU (f32, VPU)

    # Fused mu|sigma head: one MXU pass over a lane-dense [Hp, 2*Zp] weight.
    ms = jnp.dot(h.astype(jnp.bfloat16), wms_ref[...],
                 preferred_element_type=jnp.float32) + bms_ref[...]
    musig_ref[...] = ms                                       # full-width unmasked store
    mu = ms[:, :zp]                                           # lane-aligned static slices
    sigma = ms[:, zp:]

    # ---- reparameterization (padded eps lanes are exactly zero) ----
    z = mu + sigma * eps_ref[...]

    # ---- decoder ----
    hd = jnp.dot(z.astype(jnp.bfloat16), w3_ref[...],
                 preferred_element_type=jnp.float32) + b3_ref[...]
    hd = jnp.maximum(hd, 0.0)                                 # ReLU
    logits = jnp.dot(hd.astype(jnp.bfloat16), w4_ref[...],
                     preferred_element_type=jnp.float32) + b4_ref[...]
    # sigmoid via EUP exp + approx reciprocal (keeps the epilogue off the VPU divide path)
    xrec_ref[...] = pl.reciprocal(1.0 + jnp.exp(-logits), approx=True)


def vae_forward(x, eps, params, *, max_batch_tile=512):
    """x: [B, input_dim] f32, eps: [B, z_dim] f32, params: PyTorch-convention weights."""
    B, D = x.shape
    H = params["w1"].shape[0]
    Z = params["wmu"].shape[0]

    Dp = _round_up(D, 128)
    Hp = _round_up(H, 128)
    Zp = _round_up(Z, 128)

    # Batch tile: multiple of 8 sublanes, capped so double-buffered f32 tiles
    # stay well inside v7x's 64 MiB VMEM.
    TB = min(max_batch_tile, _round_up(B, 8))
    Bp = _round_up(B, TB)

    def pad2(a, rows, cols, dtype):
        r, c = a.shape
        return jnp.pad(a.astype(dtype), ((0, rows - r), (0, cols - c)))

    # Glue: pre-transpose (out,in) -> (in,out), zero-pad to lane-dense shapes,
    # cast matmul operands to bf16 (biases stay f32 for the f32 adds).
    w1 = pad2(params["w1"].T, Dp, Hp, jnp.bfloat16)
    b1 = pad2(params["b1"][None, :], 1, Hp, jnp.float32)
    wms = jnp.concatenate(
        [pad2(params["wmu"].T, Hp, Zp, jnp.bfloat16),
         pad2(params["wsg"].T, Hp, Zp, jnp.bfloat16)], axis=1)
    bms = jnp.concatenate(
        [pad2(params["bmu"][None, :], 1, Zp, jnp.float32),
         pad2(params["bsg"][None, :], 1, Zp, jnp.float32)], axis=1)
    w3 = pad2(params["w3"].T, Zp, Hp, jnp.bfloat16)
    b3 = pad2(params["b3"][None, :], 1, Hp, jnp.float32)
    w4 = pad2(params["w4"].T, Hp, Dp, jnp.bfloat16)
    b4 = pad2(params["b4"][None, :], 1, Dp, jnp.float32)

    xp = pad2(x, Bp, Dp, jnp.bfloat16)
    epsp = pad2(eps, Bp, Zp, jnp.float32)     # padded lanes stay exactly zero

    def batched(cols):
        return pl.BlockSpec((TB, cols), lambda i: (i, 0))

    def resident(shape):
        return pl.BlockSpec(shape, lambda i: (0, 0))   # weights stay resident across batch tiles

    xrec_p, musig_p = pl.pallas_call(
        functools.partial(vae_kernel, zp=Zp),
        grid=(Bp // TB,),
        in_specs=[
            batched(Dp), batched(Zp),
            resident((Dp, Hp)), resident((1, Hp)),
            resident((Hp, 2 * Zp)), resident((1, 2 * Zp)),
            resident((Zp, Hp)), resident((1, Hp)),
            resident((Hp, Dp)), resident((1, Dp)),
        ],
        out_specs=(batched(Dp), batched(2 * Zp)),
        out_shape=(
            jax.ShapeDtypeStruct((Bp, Dp), jnp.float32),      # x_reconstructed (padded)
            jax.ShapeDtypeStruct((Bp, 2 * Zp), jnp.float32),  # packed mu|sigma (padded)
        ),
        compiler_params=pltpu.CompilerParams(
            dimension_semantics=("parallel",)),
    )(xp, epsp, w1, b1, wms, bms, w3, b3, w4, b4)

    xrec = xrec_p[:B, :D]
    mu = musig_p[:B, :Z]
    sigma = musig_p[:B, Zp:Zp + Z]
    return xrec, mu, sigma


def init_params(key, input_dim, h_dim, z_dim):
    """Deterministic init mimicking PyTorch nn.Linear default U(-1/sqrt(fan_in), +)."""
    def linear(k, out_f, in_f):
        kw, kb = jax.random.split(k)
        bound = 1.0 / jnp.sqrt(in_f)
        w = jax.random.uniform(kw, (out_f, in_f), jnp.float32, -bound, bound)
        b = jax.random.uniform(kb, (out_f,), jnp.float32, -bound, bound)
        return w, b

    ks = jax.random.split(key, 5)
    w1, b1 = linear(ks[0], h_dim, input_dim)     # img_2hid
    wmu, bmu = linear(ks[1], z_dim, h_dim)       # hid_2mu
    wsg, bsg = linear(ks[2], z_dim, h_dim)       # hid_2sigma
    w3, b3 = linear(ks[3], h_dim, z_dim)         # z_2hid
    w4, b4 = linear(ks[4], input_dim, h_dim)     # hid_2img
    return dict(w1=w1, b1=b1, wmu=wmu, bmu=bmu, wsg=wsg, bsg=bsg,
                w3=w3, b3=b3, w4=w4, b4=b4)


def reference_forward(x, eps, p):
    """Pure-JAX f32 reference mirroring the PyTorch forward."""
    h = jnp.maximum(x @ p["w1"].T + p["b1"], 0.0)
    mu = h @ p["wmu"].T + p["bmu"]
    sigma = h @ p["wsg"].T + p["bsg"]
    z = mu + sigma * eps
    hd = jnp.maximum(z @ p["w3"].T + p["b3"], 0.0)
    xrec = jax.nn.sigmoid(hd @ p["w4"].T + p["b4"])
    return xrec, mu, sigma


if __name__ == "__main__":
    B, INPUT_DIM, H_DIM, Z_DIM = 8, 256, 200, 20

    key = jax.random.PRNGKey(0)
    kx, keps, kp = jax.random.split(key, 3)
    x = jax.random.uniform(kx, (B, INPUT_DIM), jnp.float32)        # "image" in [0,1)
    # TODO(synk): torch.randn_like(sigma) is sampled inside PyTorch's forward;
    # here epsilon is sampled outside and passed in for determinism.
    eps = jax.random.normal(keps, (B, Z_DIM), jnp.float32)
    params = init_params(kp, INPUT_DIM, H_DIM, Z_DIM)

    xrec, mu, sigma = vae_forward(x, eps, params)
    jax.block_until_ready((xrec, mu, sigma))

    xrec_r, mu_r, sigma_r = reference_forward(x, eps, params)
    assert xrec.shape == (B, INPUT_DIM) and mu.shape == (B, Z_DIM) and sigma.shape == (B, Z_DIM)
    # bf16 matmuls + approx reciprocal -> loose-but-meaningful tolerance vs f32 reference.
    assert jnp.allclose(xrec, xrec_r, atol=2e-2, rtol=0.0)
    assert jnp.allclose(mu, mu_r, atol=2e-2, rtol=2e-2)
    assert jnp.allclose(sigma, sigma_r, atol=2e-2, rtol=2e-2)

    print("KERNEL_OK")
</pallas_src>

<mosaic_0001>
module attributes {stable_mosaic.version = 11 : i64} {
  func.func @vae_kernel(%arg0: i32, %arg1: memref<8x256xbf16, #tpu.memory_space<vmem>>, %arg2: memref<8x128xf32, #tpu.memory_space<vmem>>, %arg3: memref<256x256xbf16, #tpu.memory_space<vmem>>, %arg4: memref<1x256xf32, #tpu.memory_space<vmem>>, %arg5: memref<256x256xbf16, #tpu.memory_space<vmem>>, %arg6: memref<1x256xf32, #tpu.memory_space<vmem>>, %arg7: memref<128x256xbf16, #tpu.memory_space<vmem>>, %arg8: memref<1x256xf32, #tpu.memory_space<vmem>>, %arg9: memref<256x256xbf16, #tpu.memory_space<vmem>>, %arg10: memref<1x256xf32, #tpu.memory_space<vmem>>, %arg11: memref<8x256xf32, #tpu.memory_space<vmem>>, %arg12: memref<8x256xf32, #tpu.memory_space<vmem>>) attributes {dimension_semantics = [#tpu.dimension_semantics<parallel>], iteration_bounds = array<i64: 1>, scalar_prefetch = 0 : i64, scratch_operands = 0 : i64, tpu.core_type = #tpu.core_type<tc>, window_params = [{transform_indices = @transform_0, window_bounds = array<i64: 8, 256>}, {transform_indices = @transform_1, window_bounds = array<i64: 8, 128>}, {pipeline_mode = #tpu.pipeline_mode<synchronous>, transform_indices = @transform_2, window_bounds = array<i64: 256, 256>}, {pipeline_mode = #tpu.pipeline_mode<synchronous>, transform_indices = @transform_3, window_bounds = array<i64: 1, 256>}, {pipeline_mode = #tpu.pipeline_mode<synchronous>, transform_indices = @transform_4, window_bounds = array<i64: 256, 256>}, {pipeline_mode = #tpu.pipeline_mode<synchronous>, transform_indices = @transform_5, window_bounds = array<i64: 1, 256>}, {pipeline_mode = #tpu.pipeline_mode<synchronous>, transform_indices = @transform_6, window_bounds = array<i64: 128, 256>}, {pipeline_mode = #tpu.pipeline_mode<synchronous>, transform_indices = @transform_7, window_bounds = array<i64: 1, 256>}, {pipeline_mode = #tpu.pipeline_mode<synchronous>, transform_indices = @transform_8, window_bounds = array<i64: 256, 256>}, {pipeline_mode = #tpu.pipeline_mode<synchronous>, transform_indices = @transform_9, window_bounds = array<i64: 1, 256>}, {transform_indices = @transform_10, window_bounds = array<i64: 8, 256>}, {transform_indices = @transform_11, window_bounds = array<i64: 8, 256>}]} {
    %c0 = arith.constant 0 : index
    %c0_0 = arith.constant 0 : index
    %0 = vector.load %arg1[%c0, %c0_0] : memref<8x256xbf16, #tpu.memory_space<vmem>>, vector<8x256xbf16>
    %c0_1 = arith.constant 0 : index
    %c0_2 = arith.constant 0 : index
    %1 = vector.load %arg3[%c0_1, %c0_2] : memref<256x256xbf16, #tpu.memory_space<vmem>>, vector<256x256xbf16>
    %cst = arith.constant dense<0.000000e+00> : vector<8x256xf32>
    %2 = tpu.matmul %0, %1, %cst {dimension_numbers = #tpu.dot_dimension_numbers<[1], [0], [0], [1], [0, 0, 1, 1], [], []>} : vector<8x256xbf16>, vector<256x256xbf16>, vector<8x256xf32> -> vector<8x256xf32>
    %c0_3 = arith.constant 0 : index
    %c0_4 = arith.constant 0 : index
    %3 = vector.load %arg4[%c0_3, %c0_4] : memref<1x256xf32, #tpu.memory_space<vmem>>, vector<1x256xf32>
    %4 = vector.broadcast %3 : vector<1x256xf32> to vector<8x256xf32>
    %5 = arith.addf %2, %4 : vector<8x256xf32>
    %cst_5 = arith.constant 0.000000e+00 : f32
    %6 = vector.broadcast %cst_5 : f32 to vector<8x256xf32>
    %7 = arith.maximumf %5, %6 : vector<8x256xf32>
    %8 = arith.truncf %7 : vector<8x256xf32> to vector<8x256xbf16>
    %c0_6 = arith.constant 0 : index
    %c0_7 = arith.constant 0 : index
    %9 = vector.load %arg5[%c0_6, %c0_7] : memref<256x256xbf16, #tpu.memory_space<vmem>>, vector<256x256xbf16>
    %cst_8 = arith.constant dense<0.000000e+00> : vector<8x256xf32>
    %10 = tpu.matmul %8, %9, %cst_8 {dimension_numbers = #tpu.dot_dimension_numbers<[1], [0], [0], [1], [0, 0, 1, 1], [], []>} : vector<8x256xbf16>, vector<256x256xbf16>, vector<8x256xf32> -> vector<8x256xf32>
    %c0_9 = arith.constant 0 : index
    %c0_10 = arith.constant 0 : index
    %11 = vector.load %arg6[%c0_9, %c0_10] : memref<1x256xf32, #tpu.memory_space<vmem>>, vector<1x256xf32>
    %12 = vector.broadcast %11 : vector<1x256xf32> to vector<8x256xf32>
    %13 = arith.addf %10, %12 : vector<8x256xf32>
    %c0_11 = arith.constant 0 : index
    %c0_12 = arith.constant 0 : index
    %14 = vector.load %arg12[%c0_11, %c0_12] : memref<8x256xf32, #tpu.memory_space<vmem>>, vector<8x256xf32>
    tpu.vector_store %arg12[%c0_11, %c0_12], %13 {strides = array<i32>} : memref<8x256xf32, #tpu.memory_space<vmem>>, vector<8x256xf32>,
    %15 = vector.extract_strided_slice %13 {offsets = [0, 0], sizes = [8, 128], strides = [1, 1]} : vector<8x256xf32> to vector<8x128xf32>
    %16 = vector.extract_strided_slice %13 {offsets = [0, 128], sizes = [8, 128], strides = [1, 1]} : vector<8x256xf32> to vector<8x128xf32>
    %c0_13 = arith.constant 0 : index
    %c0_14 = arith.constant 0 : index
    %17 = vector.load %arg2[%c0_13, %c0_14] : memref<8x128xf32, #tpu.memory_space<vmem>>, vector<8x128xf32>
    %18 = arith.mulf %16, %17 : vector<8x128xf32>
    %19 = arith.addf %15, %18 : vector<8x128xf32>
    %20 = arith.truncf %19 : vector<8x128xf32> to vector<8x128xbf16>
    %c0_15 = arith.constant 0 : index
    %c0_16 = arith.constant 0 : index
    %21 = vector.load %arg7[%c0_15, %c0_16] : memref<128x256xbf16, #tpu.memory_space<vmem>>, vector<128x256xbf16>
    %cst_17 = arith.constant dense<0.000000e+00> : vector<8x256xf32>
    %22 = tpu.matmul %20, %21, %cst_17 {dimension_numbers = #tpu.dot_dimension_numbers<[1], [0], [0], [1], [0, 0, 1, 1], [], []>} : vector<8x128xbf16>, vector<128x256xbf16>, vector<8x256xf32> -> vector<8x256xf32>
    %c0_18 = arith.constant 0 : index
    %c0_19 = arith.constant 0 : index
    %23 = vector.load %arg8[%c0_18, %c0_19] : memref<1x256xf32, #tpu.memory_space<vmem>>, vector<1x256xf32>
    %24 = vector.broadcast %23 : vector<1x256xf32> to vector<8x256xf32>
    %25 = arith.addf %22, %24 : vector<8x256xf32>
    %cst_20 = arith.constant 0.000000e+00 : f32
    %26 = vector.broadcast %cst_20 : f32 to vector<8x256xf32>
    %27 = arith.maximumf %25, %26 : vector<8x256xf32>
    %28 = arith.truncf %27 : vector<8x256xf32> to vector<8x256xbf16>
    %c0_21 = arith.constant 0 : index
    %c0_22 = arith.constant 0 : index
    %29 = vector.load %arg9[%c0_21, %c0_22] : memref<256x256xbf16, #tpu.memory_space<vmem>>, vector<256x256xbf16>
    %cst_23 = arith.constant dense<0.000000e+00> : vector<8x256xf32>
    %30 = tpu.matmul %28, %29, %cst_23 {dimension_numbers = #tpu.dot_dimension_numbers<[1], [0], [0], [1], [0, 0, 1, 1], [], []>} : vector<8x256xbf16>, vector<256x256xbf16>, vector<8x256xf32> -> vector<8x256xf32>
    %c0_24 = arith.constant 0 : index
    %c0_25 = arith.constant 0 : index
    %31 = vector.load %arg10[%c0_24, %c0_25] : memref<1x256xf32, #tpu.memory_space<vmem>>, vector<1x256xf32>
    %32 = vector.broadcast %31 : vector<1x256xf32> to vector<8x256xf32>
    %33 = arith.addf %30, %32 : vector<8x256xf32>
    %cst_26 = arith.constant 0.000000e+00 : f32
    %34 = vector.broadcast %cst_26 : f32 to vector<8x256xf32>
    %35 = arith.subf %34, %33 : vector<8x256xf32>
    %36 = math.exp %35 : vector<8x256xf32>
    %cst_27 = arith.constant 1.000000e+00 : f32
    %37 = vector.broadcast %cst_27 : f32 to vector<8x256xf32>
    %38 = arith.addf %37, %36 : vector<8x256xf32>
    %39 = tpu.reciprocal %38 {approx = true} : vector<8x256xf32> -> vector<8x256xf32>
    %c0_28 = arith.constant 0 : index
    %c0_29 = arith.constant 0 : index
    %40 = vector.load %arg11[%c0_28, %c0_29] : memref<8x256xf32, #tpu.memory_space<vmem>>, vector<8x256xf32>
    tpu.vector_store %arg11[%c0_28, %c0_29], %39 {strides = array<i32>} : memref<8x256xf32, #tpu.memory_space<vmem>>, vector<8x256xf32>,
    return
  }
  func.func @transform_0(%arg0: i32) -> (i32, i32) {
    %c0_i32 = arith.constant 0 : i32
    %c0_i32_0 = arith.constant 0 : i32
    return %arg0, %c0_i32 : i32, i32
  }
  func.func @transform_1(%arg0: i32) -> (i32, i32) {
    %c0_i32 = arith.constant 0 : i32
    %c0_i32_0 = arith.constant 0 : i32
    return %arg0, %c0_i32 : i32, i32
  }
  func.func @transform_2(%arg0: i32) -> (i32, i32) {
    %c0_i32 = arith.constant 0 : i32
    %c0_i32_0 = arith.constant 0 : i32
    %c0_i32_1 = arith.constant 0 : i32
    return %c0_i32, %c0_i32_0 : i32, i32
  }
  func.func @transform_3(%arg0: i32) -> (i32, i32) {
    %c0_i32 = arith.constant 0 : i32
    %c0_i32_0 = arith.constant 0 : i32
    %c0_i32_1 = arith.constant 0 : i32
    return %c0_i32, %c0_i32_0 : i32, i32
  }
  func.func @transform_4(%arg0: i32) -> (i32, i32) {
    %c0_i32 = arith.constant 0 : i32
    %c0_i32_0 = arith.constant 0 : i32
    %c0_i32_1 = arith.constant 0 : i32
    return %c0_i32, %c0_i32_0 : i32, i32
  }
  func.func @transform_5(%arg0: i32) -> (i32, i32) {
    %c0_i32 = arith.constant 0 : i32
    %c0_i32_0 = arith.constant 0 : i32
    %c0_i32_1 = arith.constant 0 : i32
    return %c0_i32, %c0_i32_0 : i32, i32
  }
  func.func @transform_6(%arg0: i32) -> (i32, i32) {
    %c0_i32 = arith.constant 0 : i32
    %c0_i32_0 = arith.constant 0 : i32
    %c0_i32_1 = arith.constant 0 : i32
    return %c0_i32, %c0_i32_0 : i32, i32
  }
  func.func @transform_7(%arg0: i32) -> (i32, i32) {
    %c0_i32 = arith.constant 0 : i32
    %c0_i32_0 = arith.constant 0 : i32
    %c0_i32_1 = arith.constant 0 : i32
    return %c0_i32, %c0_i32_0 : i32, i32
  }
  func.func @transform_8(%arg0: i32) -> (i32, i32) {
    %c0_i32 = arith.constant 0 : i32
    %c0_i32_0 = arith.constant 0 : i32
    %c0_i32_1 = arith.constant 0 : i32
    return %c0_i32, %c0_i32_0 : i32, i32
  }
  func.func @transform_9(%arg0: i32) -> (i32, i32) {
    %c0_i32 = arith.constant 0 : i32
    %c0_i32_0 = arith.constant 0 : i32
    %c0_i32_1 = arith.constant 0 : i32
    return %c0_i32, %c0_i32_0 : i32, i32
  }
  func.func @transform_10(%arg0: i32) -> (i32, i32) {
    %c0_i32 = arith.constant 0 : i32
    %c0_i32_0 = arith.constant 0 : i32
    return %arg0, %c0_i32 : i32, i32
  }
  func.func @transform_11(%arg0: i32) -> (i32, i32) {
    %c0_i32 = arith.constant 0 : i32
    %c0_i32_0 = arith.constant 0 : i32
    return %arg0, %c0_i32 : i32, i32
  }
}

</mosaic_0001>

<llo_original>
// kernel: tpu_custom_call.1
$region0: #{tpu_custom_call.1}
  #allocation0 [shape = 'u32[]', space=smem, size = 0x4, offset = 0x4, fixed_abs, tag = 'smem constant byte address 0x4 - core index']
  #allocation1 [shape = 'u32[72,128]{1,0:T(1,128)}', space=vmem, size = 0x9000, scoped, tag = 'internal scratch']
  %s0 = inlined_call_operand.hbm [shape: bf16[8,256], index: 0, kind: input, shape index: {}]
  %s1 = inlined_call_operand.hbm [shape: f32[8,128], index: 1, kind: input, shape index: {}]
  %s2 = inlined_call_operand.hbm [shape: bf16[256,256], index: 2, kind: input, shape index: {}]
  %s3 = inlined_call_operand.vmem [shape: f32[1,256], index: 3, kind: input, shape index: {}]
  %s4 = inlined_call_operand.hbm [shape: bf16[256,256], index: 4, kind: input, shape index: {}]
  %s5 = inlined_call_operand.vmem [shape: f32[1,256], index: 5, kind: input, shape index: {}]
  %s6 = inlined_call_operand.hbm [shape: bf16[128,256], index: 6, kind: input, shape index: {}]
  %s7 = inlined_call_operand.vmem [shape: f32[1,256], index: 7, kind: input, shape index: {}]
  %s8 = inlined_call_operand.hbm [shape: bf16[256,256], index: 8, kind: input, shape index: {}]
  %s9 = inlined_call_operand.vmem [shape: f32[1,256], index: 9, kind: input, shape index: {}]
  %s10 = inlined_call_operand.hbm [shape: f32[8,256], index: 10, kind: output, shape index: {0}]
  %s11 = inlined_call_operand.hbm [shape: f32[8,256], index: 11, kind: output, shape index: {1}]
  %12 = xla_tuple %s10, %s11
  %s13 = sld [smem:[#allocation0]]
  $region82: #{tpu_custom_call.1} parent=0
    _
  %s15 = ssub.s32 1, %s13
  %s16 = scalar_select 0, %s15, %s13
  $region1: #{tpu_custom_call.1} parent=0
    #allocation2 [shape = 'u8[4096]{0}', space=vmem, size = 0x1000, scoped, tag = 'input window, operand 0, single buffered']
    #allocation3 [shape = 's32[1]{0}', space=sflag, size = 0x4, scoped, tag = 'scoped memory for tpu_custom_call.1']
    #allocation4 [shape = 's32[1]{0}', space=sflag, size = 0x4, scoped, tag = 'scoped memory for tpu_custom_call.1']
    #allocation5 [shape = 'u8[4096]{0}', space=vmem, size = 0x1000, scoped, tag = 'input window, operand 1, single buffered']
    #allocation6 [shape = 's32[1]{0}', space=sflag, size = 0x4, scoped, tag = 'scoped memory for tpu_custom_call.1']
    #allocation7 [shape = 'u8[131072]{0}', space=vmem, size = 0x20000, scoped, tag = 'input window, operand 2, single buffered']
    #allocation8 [shape = 'u8[131072]{0}', space=vmem, size = 0x20000, scoped, tag = 'input window, operand 4, single buffered']
    #allocation9 [shape = 's32[1]{0}', space=sflag, size = 0x4, scoped, tag = 'scoped memory for tpu_custom_call.1']
    #allocation10 [shape = 'u8[65536]{0}', space=vmem, size = 0x10000, scoped, tag = 'input window, operand 6, single buffered']
    #allocation11 [shape = 'u8[131072]{0}', space=vmem, size = 0x20000, scoped, tag = 'input window, operand 8, single buffered']
    #allocation12 [shape = 's32[1]{0}', space=sflag, size = 0x4, scoped, tag = 'scoped memory for tpu_custom_call.1']
    #allocation13 [shape = 'u8[8192]{0}', space=vmem, size = 0x2000, scoped, tag = 'output window, operand 0, single buffered']
    #allocation14 [shape = 'u8[8192]{0}', space=vmem, size = 0x2000, scoped, tag = 'output window, operand 1, single buffered']
    #allocation15 [shape = 's32[1]{0}', space=sflag, size = 0x4, scoped, tag = 'scoped memory for tpu_custom_call.1']
    %17 = vsyncpa [#allocation3], 0
    %18 = vsyncpa [#allocation6], 0
    %19 = vsyncpa [#allocation9], 0
    %20 = vsyncpa [#allocation12], 0
    %21 = vsyncpa [#allocation4], 0
    %22 = vsyncpa [#allocation15], 0
    // Predicated region
    $region2: #{tpu_custom_call.1} parent=1 // pred_check
      _
    $region3: #{tpu_custom_call.1} parent=1 // pred_check_branch
      %24 = sbr.rel (0) target = $region5
    $region4: #{tpu_custom_call.1} parent=1 // pred_region
      %26 = vsyncadd [#allocation3], 0
      %s28 = sshll.u32 %s0, 4
      %s29 = int_to_ptr.hbm [resolvable:$true] %s28
      %s30 = sshll.u32 [#allocation2], 4
      %s31 = int_to_ptr.vmem [resolvable:$true] %s30
      %33 = dma.hbm_to_vmem [thread:$0]  %s29, 128, %s31, [#allocation3]
    $region5: #{tpu_custom_call.1} parent=1 // pred_fallthru
      _
    // Predicated region
    $region6: #{tpu_custom_call.1} parent=1 // pred_check
      _
    $region7: #{tpu_custom_call.1} parent=1 // pred_check_branch
      %35 = sbr.rel (0) target = $region9
    $region8: #{tpu_custom_call.1} parent=1 // pred_region
      %37 = vsyncadd [#allocation6], 0
      %s39 = sshll.u32 %s1, 4
      %s40 = int_to_ptr.hbm [resolvable:$true] %s39
      %s41 = sshll.u32 [#allocation5], 4
      %s42 = int_to_ptr.vmem [resolvable:$true] %s41
      %44 = dma.hbm_to_vmem [thread:$0]  %s40, 128, %s42, [#allocation6]
    $region9: #{tpu_custom_call.1} parent=1 // pred_fallthru
      _
    // Predicated region
    $region10: #{tpu_custom_call.1} parent=1 // pred_check
      _
    $region11: #{tpu_custom_call.1} parent=1 // pred_check_branch
      %46 = sbr.rel (0) target = $region13
    $region12: #{tpu_custom_call.1} parent=1 // pred_region
      %48 = vsyncadd [#allocation6], 0
      %s49 = sshll.u32 %s2, 4
      %s50 = int_to_ptr.hbm [resolvable:$true] %s49
      %s51 = sshll.u32 [#allocation7], 4
      %s52 = int_to_ptr.vmem [resolvable:$true] %s51
      %57 = dma.hbm_to_vmem [thread:$0]  %s50, 4096, %s52, [#allocation6], 128, 128, 8
    $region13: #{tpu_custom_call.1} parent=1 // pred_fallthru
      _
    // Predicated region
    $region14: #{tpu_custom_call.1} parent=1 // pred_check
      _
    $region15: #{tpu_custom_call.1} parent=1 // pred_check_branch
      %59 = sbr.rel (0) target = $region17
    $region16: #{tpu_custom_call.1} parent=1 // pred_region
      _
    $region17: #{tpu_custom_call.1} parent=1 // pred_fallthru
      _
    // Predicated region
    $region18: #{tpu_custom_call.1} parent=1 // pred_check
      _
    $region19: #{tpu_custom_call.1} parent=1 // pred_check_branch
      %61 = sbr.rel (0) target = $region21
    $region20: #{tpu_custom_call.1} parent=1 // pred_region
      %63 = vsyncadd [#allocation9], 0
      %s64 = sshll.u32 %s4, 4
      %s65 = int_to_ptr.hbm [resolvable:$true] %s64
      %s66 = sshll.u32 [#allocation8], 4
      %s67 = int_to_ptr.vmem [resolvable:$true] %s66
      %72 = dma.hbm_to_vmem [thread:$0]  %s65, 4096, %s67, [#allocation9], 128, 128, 8
    $region21: #{tpu_custom_call.1} parent=1 // pred_fallthru
      _
    // Predicated region
    $region22: #{tpu_custom_call.1} parent=1 // pred_check
      _
    $region23: #{tpu_custom_call.1} parent=1 // pred_check_branch
      %74 = sbr.rel (0) target = $region25
    $region24: #{tpu_custom_call.1} parent=1 // pred_region
      _
    $region25: #{tpu_custom_call.1} parent=1 // pred_fallthru
      _
    // Predicated region
    $region26: #{tpu_custom_call.1} parent=1 // pred_check
      _
    $region27: #{tpu_custom_call.1} parent=1 // pred_check_branch
      %76 = sbr.rel (0) target = $region29
    $region28: #{tpu_custom_call.1} parent=1 // pred_region
      %78 = vsyncadd [#allocation9], 0
      %s79 = sshll.u32 %s6, 4
      %s80 = int_to_ptr.hbm [resolvable:$true] %s79
      %s81 = sshll.u32 [#allocation10], 4
      %s82 = int_to_ptr.vmem [resolvable:$true] %s81
      %87 = dma.hbm_to_vmem [thread:$0]  %s80, 2048, %s82, [#allocation9], 128, 128, 8
    $region29: #{tpu_custom_call.1} parent=1 // pred_fallthru
      _
    // Predicated region
    $region30: #{tpu_custom_call.1} parent=1 // pred_check
      _
    $region31: #{tpu_custom_call.1} parent=1 // pred_check_branch
      %89 = sbr.rel (0) target = $region33
    $region32: #{tpu_custom_call.1} parent=1 // pred_region
      _
    $region33: #{tpu_custom_call.1} parent=1 // pred_fallthru
      _
    // Predicated region
    $region34: #{tpu_custom_call.1} parent=1 // pred_check
      _
    $region35: #{tpu_custom_call.1} parent=1 // pred_check_branch
      %91 = sbr.rel (0) target = $region37
    $region36: #{tpu_custom_call.1} parent=1 // pred_region
      %93 = vsyncadd [#allocation12], 0
      %s94 = sshll.u32 %s8, 4
      %s95 = int_to_ptr.hbm [resolvable:$true] %s94
      %s96 = sshll.u32 [#allocation11], 4
      %s97 = int_to_ptr.vmem [resolvable:$true] %s96
      %102 = dma.hbm_to_vmem [thread:$0]  %s95, 4096, %s97, [#allocation12], 128, 128, 8
    $region37: #{tpu_custom_call.1} parent=1 // pred_fallthru
      _
    // Predicated region
    $region38: #{tpu_custom_call.1} parent=1 // pred_check
      _
    $region39: #{tpu_custom_call.1} parent=1 // pred_check_branch
      %104 = sbr.rel (0) target = $region41
    $region40: #{tpu_custom_call.1} parent=1 // pred_region
      _
    $region41: #{tpu_custom_call.1} parent=1 // pred_fallthru
      _
    // Predicated region
    $region42: #{tpu_custom_call.1} parent=1 // pred_check
      _
    $region43: #{tpu_custom_call.1} parent=1 // pred_check_branch
      %106 = sbr.rel (0) target = $region45
    $region44: #{tpu_custom_call.1} parent=1 // pred_region
      %108 = dma.done [#allocation3], 128
    $region45: #{tpu_custom_call.1} parent=1 // pred_fallthru
      _
    // Predicated region
    $region46: #{tpu_custom_call.1} parent=1 // pred_check
      _
    $region47: #{tpu_custom_call.1} parent=1 // pred_check_branch
      %110 = sbr.rel (0) target = $region49
    $region48: #{tpu_custom_call.1} parent=1 // pred_region
      %112 = dma.done [#allocation6], 128
    $region49: #{tpu_custom_call.1} parent=1 // pred_fallthru
      _
    // Predicated region
    $region50: #{tpu_custom_call.1} parent=1 // pred_check
      _
    $region51: #{tpu_custom_call.1} parent=1 // pred_check_branch
      %114 = sbr.rel (0) target = $region53
    $region52: #{tpu_custom_call.1} parent=1 // pred_region
      %116 = dma.done [#allocation6], 4096
    $region53: #{tpu_custom_call.1} parent=1 // pred_fallthru
      _
    // Predicated region
    $region54: #{tpu_custom_call.1} parent=1 // pred_check
      _
    $region55: #{tpu_custom_call.1} parent=1 // pred_check_branch
      %118 = sbr.rel (0) target = $region57
    $region56: #{tpu_custom_call.1} parent=1 // pred_region
      %120 = dma.done [#allocation9], 4096
    $region57: #{tpu_custom_call.1} parent=1 // pred_fallthru
      _
    // Predicated region
    $region58: #{tpu_custom_call.1} parent=1 // pred_check
      _
    $region59: #{tpu_custom_call.1} parent=1 // pred_check_branch
      %122 = sbr.rel (0) target = $region61
    $region60: #{tpu_custom_call.1} parent=1 // pred_region
      %124 = dma.done [#allocation9], 2048
    $region61: #{tpu_custom_call.1} parent=1 // pred_fallthru
      _
    // Predicated region
    $region62: #{tpu_custom_call.1} parent=1 // pred_check
      _
    $region63: #{tpu_custom_call.1} parent=1 // pred_check_branch
      %126 = sbr.rel (0) target = $region65
    $region64: #{tpu_custom_call.1} parent=1 // pred_region
      %128 = dma.done [#allocation12], 4096
    $region65: #{tpu_custom_call.1} parent=1 // pred_fallthru
      _
    %v129 = vld [vmem:[#allocation2] sm:$0xff]
    %v130 = vld [vmem:[#allocation7] sm:$0xff]
    %v131 = vld [vmem:[#allocation7 + $0x8] sm:$0xff]
    %v132 = vld [vmem:[#allocation7 + $0x10] sm:$0xff]
    %v133 = vld [vmem:[#allocation7 + $0x18] sm:$0xff]
    %v134 = vld [vmem:[#allocation7 + $0x20] sm:$0xff]
    %v135 = vld [vmem:[#allocation7 + $0x28] sm:$0xff]
    %v136 = vld [vmem:[#allocation7 + $0x30] sm:$0xff]
    %v137 = vld [vmem:[#allocation7 + $0x38] sm:$0xff]
    %v138 = vld [vmem:[#allocation7 + $0x40] sm:$0xff]
    %v139 = vld [vmem:[#allocation7 + $0x48] sm:$0xff]
    %v140 = vld [vmem:[#allocation7 + $0x50] sm:$0xff]
    %v141 = vld [vmem:[#allocation7 + $0x58] sm:$0xff]
    %v142 = vld [vmem:[#allocation7 + $0x60] sm:$0xff]
    %v143 = vld [vmem:[#allocation7 + $0x68] sm:$0xff]
    %v144 = vld [vmem:[#allocation7 + $0x70] sm:$0xff]
    %v145 = vld [vmem:[#allocation7 + $0x78] sm:$0xff]
    %v146 = vld [vmem:[#allocation7 + $0x80] sm:$0xff]
    %v147 = vld [vmem:[#allocation7 + $0x88] sm:$0xff]
    %v148 = vld [vmem:[#allocation7 + $0x90] sm:$0xff]
    %v149 = vld [vmem:[#allocation7 + $0x98] sm:$0xff]
    %v150 = vld [vmem:[#allocation7 + $0xa0] sm:$0xff]
    %v151 = vld [vmem:[#allocation7 + $0xa8] sm:$0xff]
    %v152 = vld [vmem:[#allocation7 + $0xb0] sm:$0xff]
    %v153 = vld [vmem:[#allocation7 + $0xb8] sm:$0xff]
    %v154 = vld [vmem:[#allocation7 + $0xc0] sm:$0xff]
    %v155 = vld [vmem:[#allocation7 + $0xc8] sm:$0xff]
    %v156 = vld [vmem:[#allocation7 + $0xd0] sm:$0xff]
    %v157 = vld [vmem:[#allocation7 + $0xd8] sm:$0xff]
    %v158 = vld [vmem:[#allocation7 + $0xe0] sm:$0xff]
    %v159 = vld [vmem:[#allocation7 + $0xe8] sm:$0xff]
    %v160 = vld [vmem:[#allocation7 + $0xf0] sm:$0xff]
    %v161 = vld [vmem:[#allocation7 + $0xf8] sm:$0xff]
    %v162 = vld [vmem:[%s3] sm:$0x3]
    %v164 = vperm.slane %v162, 0
    %v165 = vperm.slane %v162, 1
    %v169 = vunpack.c.l.b16 %v129
    %v170 = vunpack.c.h.b16 %v129
    %v171 = vpack.c.b16 %v169, %v169
    %v172 = vpack.c.b16 %v170, %v170
    %v207 = vunpack.c.l.b16 %v130
    %v208 = vunpack.c.h.b16 %v130
    %v209 = vunpack.c.l.b16 %v131
    %v210 = vunpack.c.h.b16 %v131
    %v211 = vunpack.c.l.b16 %v132
    %v212 = vunpack.c.h.b16 %v132
    %v213 = vunpack.c.l.b16 %v133
    %v214 = vunpack.c.h.b16 %v133
    %v215 = vunpack.c.l.b16 %v134
    %v216 = vunpack.c.h.b16 %v134
    %v217 = vunpack.c.l.b16 %v135
    %v218 = vunpack.c.h.b16 %v135
    %v219 = vunpack.c.l.b16 %v136
    %v220 = vunpack.c.h.b16 %v136
    %v221 = vunpack.c.l.b16 %v137
    %v222 = vunpack.c.h.b16 %v137
    %v223 = vunpack.c.l.b16 %v138
    %v224 = vunpack.c.h.b16 %v138
    %v225 = vunpack.c.l.b16 %v139
    %v226 = vunpack.c.h.b16 %v139
    %v227 = vunpack.c.l.b16 %v140
    %v228 = vunpack.c.h.b16 %v140
    %v229 = vunpack.c.l.b16 %v141
    %v230 = vunpack.c.h.b16 %v141
    %v231 = vunpack.c.l.b16 %v142
    %v232 = vunpack.c.h.b16 %v142
    %v233 = vunpack.c.l.b16 %v143
    %v234 = vunpack.c.h.b16 %v143
    %v235 = vunpack.c.l.b16 %v144
    %v236 = vunpack.c.h.b16 %v144
    %v237 = vunpack.c.l.b16 %v145
    %v238 = vunpack.c.h.b16 %v145
    %v239 = vunpack.c.l.b16 %v146
    %v240 = vunpack.c.h.b16 %v146
    %v241 = vunpack.c.l.b16 %v147
    %v242 = vunpack.c.h.b16 %v147
    %v243 = vunpack.c.l.b16 %v148
    %v244 = vunpack.c.h.b16 %v148
    %v245 = vunpack.c.l.b16 %v149
    %v246 = vunpack.c.h.b16 %v149
    %v247 = vunpack.c.l.b16 %v150
    %v248 = vunpack.c.h.b16 %v150
    %v249 = vunpack.c.l.b16 %v151
    %v250 = vunpack.c.h.b16 %v151
    %v251 = vunpack.c.l.b16 %v152
    %v252 = vunpack.c.h.b16 %v152
    %v253 = vunpack.c.l.b16 %v153
    %v254 = vunpack.c.h.b16 %v153
    %v255 = vunpack.c.l.b16 %v154
    %v256 = vunpack.c.h.b16 %v154
    %v257 = vunpack.c.l.b16 %v155
    %v258 = vunpack.c.h.b16 %v155
    %v259 = vunpack.c.l.b16 %v156
    %v260 = vunpack.c.h.b16 %v156
    %v261 = vunpack.c.l.b16 %v157
    %v262 = vunpack.c.h.b16 %v157
    %v263 = vunpack.c.l.b16 %v158
    %v264 = vunpack.c.h.b16 %v158
    %v265 = vunpack.c.l.b16 %v159
    %v266 = vunpack.c.h.b16 %v159
    %v267 = vunpack.c.l.b16 %v160
    %v268 = vunpack.c.h.b16 %v160
    %v269 = vunpack.c.l.b16 %v161
    %v270 = vunpack.c.h.b16 %v161
    %v271 = vpack.c.b16 %v209, %v207
    %v272 = vpack.c.b16 %v210, %v208
    %v273 = vpack.c.b16 %v213, %v211
    %v274 = vpack.c.b16 %v214, %v212
    %v275 = vpack.c.b16 %v217, %v215
    %v276 = vpack.c.b16 %v218, %v216
    %v277 = vpack.c.b16 %v221, %v219
    %v278 = vpack.c.b16 %v222, %v220
    %v279 = vpack.c.b16 %v225, %v223
    %v280 = vpack.c.b16 %v226, %v224
    %v281 = vpack.c.b16 %v229, %v227
    %v282 = vpack.c.b16 %v230, %v228
    %v283 = vpack.c.b16 %v233, %v231
    %v284 = vpack.c.b16 %v234, %v232
    %v285 = vpack.c.b16 %v237, %v235
    %v286 = vpack.c.b16 %v238, %v236
    %v287 = vpack.c.b16 %v241, %v239
    %v288 = vpack.c.b16 %v242, %v240
    %v289 = vpack.c.b16 %v245, %v243
    %v290 = vpack.c.b16 %v246, %v244
    %v291 = vpack.c.b16 %v249, %v247
    %v292 = vpack.c.b16 %v250, %v248
    %v293 = vpack.c.b16 %v253, %v251
    %v294 = vpack.c.b16 %v254, %v252
    %v295 = vpack.c.b16 %v257, %v255
    %v296 = vpack.c.b16 %v258, %v256
    %v297 = vpack.c.b16 %v261, %v259
    %v298 = vpack.c.b16 %v262, %v260
    %v299 = vpack.c.b16 %v265, %v263
    %v300 = vpack.c.b16 %v266, %v264
    %v301 = vpack.c.b16 %v269, %v267
    %v302 = vpack.c.b16 %v270, %v268
    %335 = vmatpush.bf16.msra.mxu0 %v285
    %336 = vmatpush.bf16.msra.mxu0 %v283
    %337 = vmatpush.bf16.msra.mxu0 %v281
    %338 = vmatpush.bf16.msra.mxu0 %v279
    %339 = vmatpush.bf16.msra.mxu0 %v277
    %340 = vmatpush.bf16.msra.mxu0 %v275
    %341 = vmatpush.bf16.msra.mxu0 %v273
    %342 = vmatpush.bf16.msra.mxu0 %v271
    %343 = vmatmul.bf16.gmra.mxu0 %v171
    %v344 = vpop.f32.mrf.mxu0
    %v345 = vadd.f32 %v164, %v344
    %v346 = vpop.f32.mrf.mxu0
    %347 = vdwg.mxu0
    %348 = vmatpush.bf16.msra.mxu0 %v301
    %349 = vmatpush.bf16.msra.mxu0 %v299
    %350 = vmatpush.bf16.msra.mxu0 %v297
    %351 = vmatpush.bf16.msra.mxu0 %v295
    %352 = vmatpush.bf16.msra.mxu0 %v293
    %353 = vmatpush.bf16.msra.mxu0 %v291
    %354 = vmatpush.bf16.msra.mxu0 %v289
    %355 = vmatpush.bf16.msra.mxu0 %v287
    %356 = vmatmul.bf16.gmra.mxu0 %v172
    %v357 = vpop.f32.mrf.mxu0
    %v358 = vadd.f32 %v345, %v357
    %v359 = vpop.f32.mrf.mxu0
    %360 = vdwg.mxu0
    %361 = vmatpush.bf16.msra.mxu0 %v286
    %362 = vmatpush.bf16.msra.mxu0 %v284
    %363 = vmatpush.bf16.msra.mxu0 %v282
    %364 = vmatpush.bf16.msra.mxu0 %v280
    %365 = vmatpush.bf16.msra.mxu0 %v278
    %366 = vmatpush.bf16.msra.mxu0 %v276
    %367 = vmatpush.bf16.msra.mxu0 %v274
    %368 = vmatpush.bf16.msra.mxu0 %v272
    %369 = vmatmul.bf16.gmra.mxu0 %v171
    %v370 = vpop.f32.mrf.mxu0
    %v371 = vadd.f32 %v165, %v370
    %v372 = vpop.f32.mrf.mxu0
    %373 = vdwg.mxu0
    %374 = vmatpush.bf16.msra.mxu0 %v302
    %375 = vmatpush.bf16.msra.mxu0 %v300
    %376 = vmatpush.bf16.msra.mxu0 %v298
    %377 = vmatpush.bf16.msra.mxu0 %v296
    %378 = vmatpush.bf16.msra.mxu0 %v294
    %379 = vmatpush.bf16.msra.mxu0 %v292
    %380 = vmatpush.bf16.msra.mxu0 %v290
    %381 = vmatpush.bf16.msra.mxu0 %v288
    %382 = vmatmul.bf16.gmra.mxu0 %v172
    %v383 = vpop.f32.mrf.mxu0
    %v384 = vadd.f32 %v371, %v383
    %v385 = vpop.f32.mrf.mxu0
    %386 = vdwg.mxu0
    %v387 = vmax.f32 %v358, 0.0
    %v388 = vmax.f32 %v384, 0.0
    %v389 = vpack.c.bf16 %v387, %v387
    %v390 = vpack.c.bf16 %v388, %v388
    %v391 = vld [vmem:[#allocation8] sm:$0xff]
    %v392 = vld [vmem:[#allocation8 + $0x8] sm:$0xff]
    %v393 = vld [vmem:[#allocation8 + $0x10] sm:$0xff]
    %v394 = vld [vmem:[#allocation8 + $0x18] sm:$0xff]
    %v395 = vld [vmem:[#allocation8 + $0x20] sm:$0xff]
    %v396 = vld [vmem:[#allocation8 + $0x28] sm:$0xff]
    %v397 = vld [vmem:[#allocation8 + $0x30] sm:$0xff]
    %v398 = vld [vmem:[#allocation8 + $0x38] sm:$0xff]
    %v399 = vld [vmem:[#allocation8 + $0x40] sm:$0xff]
    %v400 = vld [vmem:[#allocation8 + $0x48] sm:$0xff]
    %v401 = vld [vmem:[#allocation8 + $0x50] sm:$0xff]
    %v402 = vld [vmem:[#allocation8 + $0x58] sm:$0xff]
    %v403 = vld [vmem:[#allocation8 + $0x60] sm:$0xff]
    %v404 = vld [vmem:[#allocation8 + $0x68] sm:$0xff]
    %v405 = vld [vmem:[#allocation8 + $0x70] sm:$0xff]
    %v406 = vld [vmem:[#allocation8 + $0x78] sm:$0xff]
    %v407 = vld [vmem:[#allocation8 + $0x80] sm:$0xff]
    %v408 = vld [vmem:[#allocation8 + $0x88] sm:$0xff]
    %v409 = vld [vmem:[#allocation8 + $0x90] sm:$0xff]
    %v410 = vld [vmem:[#allocation8 + $0x98] sm:$0xff]
    %v411 = vld [vmem:[#allocation8 + $0xa0] sm:$0xff]
    %v412 = vld [vmem:[#allocation8 + $0xa8] sm:$0xff]
    %v413 = vld [vmem:[#allocation8 + $0xb0] sm:$0xff]
    %v414 = vld [vmem:[#allocation8 + $0xb8] sm:$0xff]
    %v415 = vld [vmem:[#allocation8 + $0xc0] sm:$0xff]
    %v416 = vld [vmem:[#allocation8 + $0xc8] sm:$0xff]
    %v417 = vld [vmem:[#allocation8 + $0xd0] sm:$0xff]
    %v418 = vld [vmem:[#allocation8 + $0xd8] sm:$0xff]
    %v419 = vld [vmem:[#allocation8 + $0xe0] sm:$0xff]
    %v420 = vld [vmem:[#allocation8 + $0xe8] sm:$0xff]
    %v421 = vld [vmem:[#allocation8 + $0xf0] sm:$0xff]
    %v422 = vld [vmem:[#allocation8 + $0xf8] sm:$0xff]
    %v423 = vld [vmem:[%s5] sm:$0x3]
    %v425 = vperm.slane %v423, 0
    %v426 = vperm.slane %v423, 1
    %v461 = vunpack.c.l.b16 %v391
    %v462 = vunpack.c.h.b16 %v391
    %v463 = vunpack.c.l.b16 %v392
    %v464 = vunpack.c.h.b16 %v392
    %v465 = vunpack.c.l.b16 %v393
    %v466 = vunpack.c.h.b16 %v393
    %v467 = vunpack.c.l.b16 %v394
    %v468 = vunpack.c.h.b16 %v394
    %v469 = vunpack.c.l.b16 %v395
    %v470 = vunpack.c.h.b16 %v395
    %v471 = vunpack.c.l.b16 %v396
    %v472 = vunpack.c.h.b16 %v396
    %v473 = vunpack.c.l.b16 %v397
    %v474 = vunpack.c.h.b16 %v397
    %v475 = vunpack.c.l.b16 %v398
    %v476 = vunpack.c.h.b16 %v398
    %v477 = vunpack.c.l.b16 %v399
    %v478 = vunpack.c.h.b16 %v399
    %v479 = vunpack.c.l.b16 %v400
    %v480 = vunpack.c.h.b16 %v400
    %v481 = vunpack.c.l.b16 %v401
    %v482 = vunpack.c.h.b16 %v401
    %v483 = vunpack.c.l.b16 %v402
    %v484 = vunpack.c.h.b16 %v402
    %v485 = vunpack.c.l.b16 %v403
    %v486 = vunpack.c.h.b16 %v403
    %v487 = vunpack.c.l.b16 %v404
    %v488 = vunpack.c.h.b16 %v404
    %v489 = vunpack.c.l.b16 %v405
    %v490 = vunpack.c.h.b16 %v405
    %v491 = vunpack.c.l.b16 %v406
    %v492 = vunpack.c.h.b16 %v406
    %v493 = vunpack.c.l.b16 %v407
    %v494 = vunpack.c.h.b16 %v407
    %v495 = vunpack.c.l.b16 %v408
    %v496 = vunpack.c.h.b16 %v408
    %v497 = vunpack.c.l.b16 %v409
    %v498 = vunpack.c.h.b16 %v409
    %v499 = vunpack.c.l.b16 %v410
    %v500 = vunpack.c.h.b16 %v410
    %v501 = vunpack.c.l.b16 %v411
    %v502 = vunpack.c.h.b16 %v411
    %v503 = vunpack.c.l.b16 %v412
    %v504 = vunpack.c.h.b16 %v412
    %v505 = vunpack.c.l.b16 %v413
    %v506 = vunpack.c.h.b16 %v413
    %v507 = vunpack.c.l.b16 %v414
    %v508 = vunpack.c.h.b16 %v414
    %v509 = vunpack.c.l.b16 %v415
    %v510 = vunpack.c.h.b16 %v415
    %v511 = vunpack.c.l.b16 %v416
    %v512 = vunpack.c.h.b16 %v416
    %v513 = vunpack.c.l.b16 %v417
    %v514 = vunpack.c.h.b16 %v417
    %v515 = vunpack.c.l.b16 %v418
    %v516 = vunpack.c.h.b16 %v418
    %v517 = vunpack.c.l.b16 %v419
    %v518 = vunpack.c.h.b16 %v419
    %v519 = vunpack.c.l.b16 %v420
    %v520 = vunpack.c.h.b16 %v420
    %v521 = vunpack.c.l.b16 %v421
    %v522 = vunpack.c.h.b16 %v421
    %v523 = vunpack.c.l.b16 %v422
    %v524 = vunpack.c.h.b16 %v422
    %v525 = vpack.c.b16 %v463, %v461
    %v526 = vpack.c.b16 %v464, %v462
    %v527 = vpack.c.b16 %v467, %v465
    %v528 = vpack.c.b16 %v468, %v466
    %v529 = vpack.c.b16 %v471, %v469
    %v530 = vpack.c.b16 %v472, %v470
    %v531 = vpack.c.b16 %v475, %v473
    %v532 = vpack.c.b16 %v476, %v474
    %v533 = vpack.c.b16 %v479, %v477
    %v534 = vpack.c.b16 %v480, %v478
    %v535 = vpack.c.b16 %v483, %v481
    %v536 = vpack.c.b16 %v484, %v482
    %v537 = vpack.c.b16 %v487, %v485
    %v538 = vpack.c.b16 %v488, %v486
    %v539 = vpack.c.b16 %v491, %v489
    %v540 = vpack.c.b16 %v492, %v490
    %v541 = vpack.c.b16 %v495, %v493
    %v542 = vpack.c.b16 %v496, %v494
    %v543 = vpack.c.b16 %v499, %v497
    %v544 = vpack.c.b16 %v500, %v498
    %v545 = vpack.c.b16 %v503, %v501
    %v546 = vpack.c.b16 %v504, %v502
    %v547 = vpack.c.b16 %v507, %v505
    %v548 = vpack.c.b16 %v508, %v506
    %v549 = vpack.c.b16 %v511, %v509
    %v550 = vpack.c.b16 %v512, %v510
    %v551 = vpack.c.b16 %v515, %v513
    %v552 = vpack.c.b16 %v516, %v514
    %v553 = vpack.c.b16 %v519, %v517
    %v554 = vpack.c.b16 %v520, %v518
    %v555 = vpack.c.b16 %v523, %v521
    %v556 = vpack.c.b16 %v524, %v522
    %589 = vmatpush.bf16.msra.mxu0 %v539
    %590 = vmatpush.bf16.msra.mxu0 %v537
    %591 = vmatpush.bf16.msra.mxu0 %v535
    %592 = vmatpush.bf16.msra.mxu0 %v533
    %593 = vmatpush.bf16.msra.mxu0 %v531
    %594 = vmatpush.bf16.msra.mxu0 %v529
    %595 = vmatpush.bf16.msra.mxu0 %v527
    %596 = vmatpush.bf16.msra.mxu0 %v525
    %597 = vmatmul.bf16.gmra.mxu0 %v389
    %v598 = vpop.f32.mrf.mxu0
    %v599 = vadd.f32 %v425, %v598
    %v600 = vpop.f32.mrf.mxu0
    %601 = vdwg.mxu0
    %602 = vmatpush.bf16.msra.mxu0 %v555
    %603 = vmatpush.bf16.msra.mxu0 %v553
    %604 = vmatpush.bf16.msra.mxu0 %v551
    %605 = vmatpush.bf16.msra.mxu0 %v549
    %606 = vmatpush.bf16.msra.mxu0 %v547
    %607 = vmatpush.bf16.msra.mxu0 %v545
    %608 = vmatpush.bf16.msra.mxu0 %v543
    %609 = vmatpush.bf16.msra.mxu0 %v541
    %610 = vmatmul.bf16.gmra.mxu0 %v390
    %v611 = vpop.f32.mrf.mxu0
    %v612 = vadd.f32 %v599, %v611
    %v613 = vpop.f32.mrf.mxu0
    %614 = vdwg.mxu0
    %615 = vmatpush.bf16.msra.mxu0 %v540
    %616 = vmatpush.bf16.msra.mxu0 %v538
    %617 = vmatpush.bf16.msra.mxu0 %v536
    %618 = vmatpush.bf16.msra.mxu0 %v534
    %619 = vmatpush.bf16.msra.mxu0 %v532
    %620 = vmatpush.bf16.msra.mxu0 %v530
    %621 = vmatpush.bf16.msra.mxu0 %v528
    %622 = vmatpush.bf16.msra.mxu0 %v526
    %623 = vmatmul.bf16.gmra.mxu0 %v389
    %v624 = vpop.f32.mrf.mxu0
    %v625 = vadd.f32 %v426, %v624
    %v626 = vpop.f32.mrf.mxu0
    %627 = vdwg.mxu0
    %628 = vmatpush.bf16.msra.mxu0 %v556
    %629 = vmatpush.bf16.msra.mxu0 %v554
    %630 = vmatpush.bf16.msra.mxu0 %v552
    %631 = vmatpush.bf16.msra.mxu0 %v550
    %632 = vmatpush.bf16.msra.mxu0 %v548
    %633 = vmatpush.bf16.msra.mxu0 %v546
    %634 = vmatpush.bf16.msra.mxu0 %v544
    %635 = vmatpush.bf16.msra.mxu0 %v542
    %636 = vmatmul.bf16.gmra.mxu0 %v390
    %v637 = vpop.f32.mrf.mxu0
    %v638 = vadd.f32 %v625, %v637
    %v639 = vpop.f32.mrf.mxu0
    %640 = vdwg.mxu0
    %641 = vst [vmem:[#allocation14] sm:$0xff] %v612
    %642 = vst [vmem:[#allocation14 + $0x8] sm:$0xff] %v638
    %v643 = vld [vmem:[#allocation5] sm:$0xff]
    %v644 = vmul.f32 %v638, %v643
    %v645 = vadd.f32 %v612, %v644
    %v646 = vpack.c.bf16 %v645, %v645
    %v647 = vld [vmem:[#allocation10] sm:$0xff]
    %v648 = vld [vmem:[#allocation10 + $0x8] sm:$0xff]
    %v649 = vld [vmem:[#allocation10 + $0x10] sm:$0xff]
    %v650 = vld [vmem:[#allocation10 + $0x18] sm:$0xff]
    %v651 = vld [vmem:[#allocation10 + $0x20] sm:$0xff]
    %v652 = vld [vmem:[#allocation10 + $0x28] sm:$0xff]
    %v653 = vld [vmem:[#allocation10 + $0x30] sm:$0xff]
    %v654 = vld [vmem:[#allocation10 + $0x38] sm:$0xff]
    %v655 = vld [vmem:[#allocation10 + $0x40] sm:$0xff]
    %v656 = vld [vmem:[#allocation10 + $0x48] sm:$0xff]
    %v657 = vld [vmem:[#allocation10 + $0x50] sm:$0xff]
    %v658 = vld [vmem:[#allocation10 + $0x58] sm:$0xff]
    %v659 = vld [vmem:[#allocation10 + $0x60] sm:$0xff]
    %v660 = vld [vmem:[#allocation10 + $0x68] sm:$0xff]
    %v661 = vld [vmem:[#allocation10 + $0x70] sm:$0xff]
    %v662 = vld [vmem:[#allocation10 + $0x78] sm:$0xff]
    %v663 = vld [vmem:[%s7] sm:$0x3]
    %v665 = vperm.slane %v663, 0
    %v666 = vperm.slane %v663, 1
    %v685 = vunpack.c.l.b16 %v647
    %v686 = vunpack.c.h.b16 %v647
    %v687 = vunpack.c.l.b16 %v648
    %v688 = vunpack.c.h.b16 %v648
    %v689 = vunpack.c.l.b16 %v649
    %v690 = vunpack.c.h.b16 %v649
    %v691 = vunpack.c.l.b16 %v650
    %v692 = vunpack.c.h.b16 %v650
    %v693 = vunpack.c.l.b16 %v651
    %v694 = vunpack.c.h.b16 %v651
    %v695 = vunpack.c.l.b16 %v652
    %v696 = vunpack.c.h.b16 %v652
    %v697 = vunpack.c.l.b16 %v653
    %v698 = vunpack.c.h.b16 %v653
    %v699 = vunpack.c.l.b16 %v654
    %v700 = vunpack.c.h.b16 %v654
    %v701 = vunpack.c.l.b16 %v655
    %v702 = vunpack.c.h.b16 %v655
    %v703 = vunpack.c.l.b16 %v656
    %v704 = vunpack.c.h.b16 %v656
    %v705 = vunpack.c.l.b16 %v657
    %v706 = vunpack.c.h.b16 %v657
    %v707 = vunpack.c.l.b16 %v658
    %v708 = vunpack.c.h.b16 %v658
    %v709 = vunpack.c.l.b16 %v659
    %v710 = vunpack.c.h.b16 %v659
    %v711 = vunpack.c.l.b16 %v660
    %v712 = vunpack.c.h.b16 %v660
    %v713 = vunpack.c.l.b16 %v661
    %v714 = vunpack.c.h.b16 %v661
    %v715 = vunpack.c.l.b16 %v662
    %v716 = vunpack.c.h.b16 %v662
    %v717 = vpack.c.b16 %v687, %v685
    %v718 = vpack.c.b16 %v688, %v686
    %v719 = vpack.c.b16 %v691, %v689
    %v720 = vpack.c.b16 %v692, %v690
    %v721 = vpack.c.b16 %v695, %v693
    %v722 = vpack.c.b16 %v696, %v694
    %v723 = vpack.c.b16 %v699, %v697
    %v724 = vpack.c.b16 %v700, %v698
    %v725 = vpack.c.b16 %v703, %v701
    %v726 = vpack.c.b16 %v704, %v702
    %v727 = vpack.c.b16 %v707, %v705
    %v728 = vpack.c.b16 %v708, %v706
    %v729 = vpack.c.b16 %v711, %v709
    %v730 = vpack.c.b16 %v712, %v710
    %v731 = vpack.c.b16 %v715, %v713
    %v732 = vpack.c.b16 %v716, %v714
    %749 = vmatpush.bf16.msra.mxu0 %v731
    %750 = vmatpush.bf16.msra.mxu0 %v729
    %751 = vmatpush.bf16.msra.mxu0 %v727
    %752 = vmatpush.bf16.msra.mxu0 %v725
    %753 = vmatpush.bf16.msra.mxu0 %v723
    %754 = vmatpush.bf16.msra.mxu0 %v721
    %755 = vmatpush.bf16.msra.mxu0 %v719
    %756 = vmatpush.bf16.msra.mxu0 %v717
    %757 = vmatmul.bf16.gmra.mxu0 %v646
    %v758 = vpop.f32.mrf.mxu0
    %v759 = vadd.f32 %v665, %v758
    %v760 = vpop.f32.mrf.mxu0
    %761 = vdwg.mxu0
    %762 = vmatpush.bf16.msra.mxu0 %v732
    %763 = vmatpush.bf16.msra.mxu0 %v730
    %764 = vmatpush.bf16.msra.mxu0 %v728
    %765 = vmatpush.bf16.msra.mxu0 %v726
    %766 = vmatpush.bf16.msra.mxu0 %v724
    %767 = vmatpush.bf16.msra.mxu0 %v722
    %768 = vmatpush.bf16.msra.mxu0 %v720
    %769 = vmatpush.bf16.msra.mxu0 %v718
    %770 = vmatmul.bf16.gmra.mxu0 %v646
    %v771 = vpop.f32.mrf.mxu0
    %v772 = vadd.f32 %v666, %v771
    %v773 = vpop.f32.mrf.mxu0
    %774 = vdwg.mxu0
    %v775 = vmax.f32 %v759, 0.0
    %v776 = vmax.f32 %v772, 0.0
    %v777 = vpack.c.bf16 %v775, %v775
    %v778 = vpack.c.bf16 %v776, %v776
    %v779 = vld [vmem:[#allocation11] sm:$0xff]
    %v780 = vld [vmem:[#allocation11 + $0x8] sm:$0xff]
    %v781 = vld [vmem:[#allocation11 + $0x10] sm:$0xff]
    %v782 = vld [vmem:[#allocation11 + $0x18] sm:$0xff]
    %v783 = vld [vmem:[#allocation11 + $0x20] sm:$0xff]
    %v784 = vld [vmem:[#allocation11 + $0x28] sm:$0xff]
    %v785 = vld [vmem:[#allocation11 + $0x30] sm:$0xff]
    %v786 = vld [vmem:[#allocation11 + $0x38] sm:$0xff]
    %v787 = vld [vmem:[#allocation11 + $0x40] sm:$0xff]
    %v788 = vld [vmem:[#allocation11 + $0x48] sm:$0xff]
    %v789 = vld [vmem:[#allocation11 + $0x50] sm:$0xff]
    %v790 = vld [vmem:[#allocation11 + $0x58] sm:$0xff]
    %v791 = vld [vmem:[#allocation11 + $0x60] sm:$0xff]
    %v792 = vld [vmem:[#allocation11 + $0x68] sm:$0xff]
    %v793 = vld [vmem:[#allocation11 + $0x70] sm:$0xff]
    %v794 = vld [vmem:[#allocation11 + $0x78] sm:$0xff]
    %v795 = vld [vmem:[#allocation11 + $0x80] sm:$0xff]
    %v796 = vld [vmem:[#allocation11 + $0x88] sm:$0xff]
    %v797 = vld [vmem:[#allocation11 + $0x90] sm:$0xff]
    %v798 = vld [vmem:[#allocation11 + $0x98] sm:$0xff]
    %v799 = vld [vmem:[#allocation11 + $0xa0] sm:$0xff]
    %v800 = vld [vmem:[#allocation11 + $0xa8] sm:$0xff]
    %v801 = vld [vmem:[#allocation11 + $0xb0] sm:$0xff]
    %v802 = vld [vmem:[#allocation11 + $0xb8] sm:$0xff]
    %v803 = vld [vmem:[#allocation11 + $0xc0] sm:$0xff]
    %v804 = vld [vmem:[#allocation11 + $0xc8] sm:$0xff]
    %v805 = vld [vmem:[#allocation11 + $0xd0] sm:$0xff]
    %v806 = vld [vmem:[#allocation11 + $0xd8] sm:$0xff]
    %v807 = vld [vmem:[#allocation11 + $0xe0] sm:$0xff]
    %v808 = vld [vmem:[#allocation11 + $0xe8] sm:$0xff]
    %v809 = vld [vmem:[#allocation11 + $0xf0] sm:$0xff]
    %v810 = vld [vmem:[#allocation11 + $0xf8] sm:$0xff]
    %v811 = vld [vmem:[%s9] sm:$0x3]
    %v813 = vperm.slane %v811, 0
    %v814 = vperm.slane %v811, 1
    %v849 = vunpack.c.l.b16 %v779
    %v850 = vunpack.c.h.b16 %v779
    %v851 = vunpack.c.l.b16 %v780
    %v852 = vunpack.c.h.b16 %v780
    %v853 = vunpack.c.l.b16 %v781
    %v854 = vunpack.c.h.b16 %v781
    %v855 = vunpack.c.l.b16 %v782
    %v856 = vunpack.c.h.b16 %v782
    %v857 = vunpack.c.l.b16 %v783
    %v858 = vunpack.c.h.b16 %v783
    %v859 = vunpack.c.l.b16 %v784
    %v860 = vunpack.c.h.b16 %v784
    %v861 = vunpack.c.l.b16 %v785
    %v862 = vunpack.c.h.b16 %v785
    %v863 = vunpack.c.l.b16 %v786
    %v864 = vunpack.c.h.b16 %v786
    %v865 = vunpack.c.l.b16 %v787
    %v866 = vunpack.c.h.b16 %v787
    %v867 = vunpack.c.l.b16 %v788
    %v868 = vunpack.c.h.b16 %v788
    %v869 = vunpack.c.l.b16 %v789
    %v870 = vunpack.c.h.b16 %v789
    %v871 = vunpack.c.l.b16 %v790
    %v872 = vunpack.c.h.b16 %v790
    %v873 = vunpack.c.l.b16 %v791
    %v874 = vunpack.c.h.b16 %v791
    %v875 = vunpack.c.l.b16 %v792
    %v876 = vunpack.c.h.b16 %v792
    %v877 = vunpack.c.l.b16 %v793
    %v878 = vunpack.c.h.b16 %v793
    %v879 = vunpack.c.l.b16 %v794
    %v880 = vunpack.c.h.b16 %v794
    %v881 = vunpack.c.l.b16 %v795
    %v882 = vunpack.c.h.b16 %v795
    %v883 = vunpack.c.l.b16 %v796
    %v884 = vunpack.c.h.b16 %v796
    %v885 = vunpack.c.l.b16 %v797
    %v886 = vunpack.c.h.b16 %v797
    %v887 = vunpack.c.l.b16 %v798
    %v888 = vunpack.c.h.b16 %v798
    %v889 = vunpack.c.l.b16 %v799
    %v890 = vunpack.c.h.b16 %v799
    %v891 = vunpack.c.l.b16 %v800
    %v892 = vunpack.c.h.b16 %v800
    %v893 = vunpack.c.l.b16 %v801
    %v894 = vunpack.c.h.b16 %v801
    %v895 = vunpack.c.l.b16 %v802
    %v896 = vunpack.c.h.b16 %v802
    %v897 = vunpack.c.l.b16 %v803
    %v898 = vunpack.c.h.b16 %v803
    %v899 = vunpack.c.l.b16 %v804
    %v900 = vunpack.c.h.b16 %v804
    %v901 = vunpack.c.l.b16 %v805
    %v902 = vunpack.c.h.b16 %v805
    %v903 = vunpack.c.l.b16 %v806
    %v904 = vunpack.c.h.b16 %v806
    %v905 = vunpack.c.l.b16 %v807
    %v906 = vunpack.c.h.b16 %v807
    %v907 = vunpack.c.l.b16 %v808
    %v908 = vunpack.c.h.b16 %v808
    %v909 = vunpack.c.l.b16 %v809
    %v910 = vunpack.c.h.b16 %v809
    %v911 = vunpack.c.l.b16 %v810
    %v912 = vunpack.c.h.b16 %v810
    %v913 = vpack.c.b16 %v851, %v849
    %v914 = vpack.c.b16 %v852, %v850
    %v915 = vpack.c.b16 %v855, %v853
    %v916 = vpack.c.b16 %v856, %v854
    %v917 = vpack.c.b16 %v859, %v857
    %v918 = vpack.c.b16 %v860, %v858
    %v919 = vpack.c.b16 %v863, %v861
    %v920 = vpack.c.b16 %v864, %v862
    %v921 = vpack.c.b16 %v867, %v865
    %v922 = vpack.c.b16 %v868, %v866
    %v923 = vpack.c.b16 %v871, %v869
    %v924 = vpack.c.b16 %v872, %v870
    %v925 = vpack.c.b16 %v875, %v873
    %v926 = vpack.c.b16 %v876, %v874
    %v927 = vpack.c.b16 %v879, %v877
    %v928 = vpack.c.b16 %v880, %v878
    %v929 = vpack.c.b16 %v883, %v881
    %v930 = vpack.c.b16 %v884, %v882
    %v931 = vpack.c.b16 %v887, %v885
    %v932 = vpack.c.b16 %v888, %v886
    %v933 = vpack.c.b16 %v891, %v889
    %v934 = vpack.c.b16 %v892, %v890
    %v935 = vpack.c.b16 %v895, %v893
    %v936 = vpack.c.b16 %v896, %v894
    %v937 = vpack.c.b16 %v899, %v897
    %v938 = vpack.c.b16 %v900, %v898
    %v939 = vpack.c.b16 %v903, %v901
    %v940 = vpack.c.b16 %v904, %v902
    %v941 = vpack.c.b16 %v907, %v905
    %v942 = vpack.c.b16 %v908, %v906
    %v943 = vpack.c.b16 %v911, %v909
    %v944 = vpack.c.b16 %v912, %v910
    %977 = vmatpush.bf16.msra.mxu0 %v927
    %978 = vmatpush.bf16.msra.mxu0 %v925
    %979 = vmatpush.bf16.msra.mxu0 %v923
    %980 = vmatpush.bf16.msra.mxu0 %v921
    %981 = vmatpush.bf16.msra.mxu0 %v919
    %982 = vmatpush.bf16.msra.mxu0 %v917
    %983 = vmatpush.bf16.msra.mxu0 %v915
    %984 = vmatpush.bf16.msra.mxu0 %v913
    %985 = vmatmul.bf16.gmra.mxu0 %v777
    %v986 = vpop.f32.mrf.mxu0
    %v987 = vadd.f32 %v813, %v986
    %v988 = vpop.f32.mrf.mxu0
    %989 = vdwg.mxu0
    %990 = vmatpush.bf16.msra.mxu0 %v943
    %991 = vmatpush.bf16.msra.mxu0 %v941
    %992 = vmatpush.bf16.msra.mxu0 %v939
    %993 = vmatpush.bf16.msra.mxu0 %v937
    %994 = vmatpush.bf16.msra.mxu0 %v935
    %995 = vmatpush.bf16.msra.mxu0 %v933
    %996 = vmatpush.bf16.msra.mxu0 %v931
    %997 = vmatpush.bf16.msra.mxu0 %v929
    %998 = vmatmul.bf16.gmra.mxu0 %v778
    %v999 = vpop.f32.mrf.mxu0
    %v1000 = vadd.f32 %v987, %v999
    %v1001 = vpop.f32.mrf.mxu0
    %1002 = vdwg.mxu0
    %1003 = vmatpush.bf16.msra.mxu0 %v928
    %1004 = vmatpush.bf16.msra.mxu0 %v926
    %1005 = vmatpush.bf16.msra.mxu0 %v924
    %1006 = vmatpush.bf16.msra.mxu0 %v922
    %1007 = vmatpush.bf16.msra.mxu0 %v920
    %1008 = vmatpush.bf16.msra.mxu0 %v918
    %1009 = vmatpush.bf16.msra.mxu0 %v916
    %1010 = vmatpush.bf16.msra.mxu0 %v914
    %1011 = vmatmul.bf16.gmra.mxu0 %v777
    %v1012 = vpop.f32.mrf.mxu0
    %v1013 = vadd.f32 %v814, %v1012
    %v1014 = vpop.f32.mrf.mxu0
    %1015 = vdwg.mxu0
    %1016 = vmatpush.bf16.msra.mxu0 %v944
    %1017 = vmatpush.bf16.msra.mxu0 %v942
    %1018 = vmatpush.bf16.msra.mxu0 %v940
    %1019 = vmatpush.bf16.msra.mxu0 %v938
    %1020 = vmatpush.bf16.msra.mxu0 %v936
    %1021 = vmatpush.bf16.msra.mxu0 %v934
    %1022 = vmatpush.bf16.msra.mxu0 %v932
    %1023 = vmatpush.bf16.msra.mxu0 %v930
    %1024 = vmatmul.bf16.gmra.mxu0 %v778
    %v1025 = vpop.f32.mrf.mxu0
    %v1026 = vadd.f32 %v1013, %v1025
    %v1027 = vpop.f32.mrf.mxu0
    %1028 = vdwg.mxu0
    %v1029 = vsub.f32 0.0, %v1000
    %v1030 = vsub.f32 0.0, %v1026
    %v1031 = vmul.f32 %v1029, 1.442695
    %v1032 = vpow.pop %v1031
    %v1033 = vmul.f32 %v1030, 1.442695
    %v1034 = vpow.pop %v1033
    %v1035 = vadd.f32 %v1032, 1.0
    %v1036 = vadd.f32 %v1034, 1.0
    %v1037 = vrcp.pop %v1035
    %v1038 = vrcp.pop %v1036
    %1039 = vst [vmem:[#allocation13] sm:$0xff] %v1037
    %1040 = vst [vmem:[#allocation13 + $0x8] sm:$0xff] %v1038
    // Predicated region
    $region66: #{tpu_custom_call.1} parent=1 // pred_check
      _
    $region67: #{tpu_custom_call.1} parent=1 // pred_check_branch
      %1042 = sbr.rel (0) target = $region69
    $region68: #{tpu_custom_call.1} parent=1 // pred_region
      %1044 = vsyncadd [#allocation4], 0
      %s1046 = sshll.u32 [#allocation13], 4
      %s1047 = int_to_ptr.vmem [resolvable:$true] %s1046
      %s1048 = sshll.u32 %s10, 4
      %s1049 = int_to_ptr.hbm [resolvable:$true] %s1048
      %1051 = dma.vmem_to_hbm [thread:$0]  %s1047, 256, %s1049, [#allocation4]
    $region69: #{tpu_custom_call.1} parent=1 // pred_fallthru
      _
    // Predicated region
    $region70: #{tpu_custom_call.1} parent=1 // pred_check
      _
    $region71: #{tpu_custom_call.1} parent=1 // pred_check_branch
      %1053 = sbr.rel (0) target = $region73
    $region72: #{tpu_custom_call.1} parent=1 // pred_region
      %1055 = vsyncadd [#allocation15], 0
      %s1057 = sshll.u32 [#allocation14], 4
      %s1058 = int_to_ptr.vmem [resolvable:$true] %s1057
      %s1059 = sshll.u32 %s11, 4
      %s1060 = int_to_ptr.hbm [resolvable:$true] %s1059
      %1062 = dma.vmem_to_hbm [thread:$0]  %s1058, 256, %s1060, [#allocation15]
    $region73: #{tpu_custom_call.1} parent=1 // pred_fallthru
      _
    // Predicated region
    $region74: #{tpu_custom_call.1} parent=1 // pred_check
      _
    $region75: #{tpu_custom_call.1} parent=1 // pred_check_branch
      %1064 = sbr.rel (0) target = $region77
    $region76: #{tpu_custom_call.1} parent=1 // pred_region
      %1066 = dma.done [#allocation4], 256
    $region77: #{tpu_custom_call.1} parent=1 // pred_fallthru
      _
    // Predicated region
    $region78: #{tpu_custom_call.1} parent=1 // pred_check
      _
    $region79: #{tpu_custom_call.1} parent=1 // pred_check_branch
      %1068 = sbr.rel (0) target = $region81
    $region80: #{tpu_custom_call.1} parent=1 // pred_region
      %1070 = dma.done [#allocation15], 256
    $region81: #{tpu_custom_call.1} parent=1 // pred_fallthru
      _
    %1071 = vsyncpa [#allocation3], 1
    %1072 = vsyncpa [#allocation6], 1
    %1073 = vsyncpa [#allocation9], 1
    %1074 = vsyncpa [#allocation12], 1
    %1075 = vsyncpa [#allocation4], 1
    %1076 = vsyncpa [#allocation15], 1

</llo_original>
